<compile_context>
chip_gen: v6e
topology: v6e:2x2x1
jax: 0.10.0
libtpu: 0.0.40
codegen_flags: <defaults>
</compile_context>

<pallas_src>
import jax
import jax.numpy as jnp
import numpy as np
from jax.experimental import pallas as pl
from jax.experimental.pallas import tpu as pltpu


def _make_kernel(C: int, H: int, W: int):
    HW = H * W

    def kernel(x_ref, o_ref):
        """x_ref: (TB, C*H*W) lane-dense slab of TB images.  o_ref: (TB, 1)."""
        # Channel reduction: accumulate while casting, one f32 (TB, HW) slab live.
        S = x_ref[:, pl.ds(0, HW)].astype(jnp.float32)
        for c in range(1, C):
            S = S + x_ref[:, pl.ds(c * HW, HW)].astype(jnp.float32)

        # Image-edge validity masks on the flattened spatial axis, (1, HW) so
        # the selects broadcast over the batch sublanes.
        col = jax.lax.broadcasted_iota(jnp.int32, (1, HW), 1)
        xcoord = col % W
        m_top = col >= W                  # (y-1, x) neighbour is inside the image
        m_bot = col < HW - W              # (y+1, x) neighbour is inside the image
        m_left = xcoord != 0              # (y, x-1) neighbour is inside the image
        m_right = xcoord != W - 1         # (y, x+1) neighbour is inside the image

        # Separable 3x3 box sum with implicit zero padding:
        # XLU lane rotations (pltpu.roll == jnp.roll semantics) + VPU selects.
        up = pltpu.roll(S, shift=W, axis=1)          # value at (y-1, x)
        down = pltpu.roll(S, shift=HW - W, axis=1)   # value at (y+1, x)
        rows = jnp.where(m_top, up, 0.0) + S + jnp.where(m_bot, down, 0.0)

        left = pltpu.roll(rows, shift=1, axis=1)          # value at (y, x-1)
        right = pltpu.roll(rows, shift=HW - 1, axis=1)    # value at (y, x+1)
        box = jnp.where(m_left, left, 0.0) + rows + jnp.where(m_right, right, 0.0)

        # conv weight = -1 everywhere, +1 at center  =>  F = S - (box - S) = 2S - box
        F = 2.0 * S - box

        # AdaptiveMaxPool2d(1): per-image spatial max (single lane reduce).
        o_ref[...] = jnp.max(F, axis=1, keepdims=True)

    return kernel


def _choose_block_batch(N, C, HW, itemsize, target_bytes=8 << 20):
    """Pick TB from the true VMEM footprint of one grid step.

    Footprint per image = double-buffered lane-dense input slab
    (2 * C*HW * itemsize) + ~8 live f32 (HW,) temporaries (S, rows, rolled
    copies, box, F).  Lane-dense blocks mean no (8,128) padding waste.
    """
    per_img = 2 * C * HW * itemsize + 8 * HW * 4
    tb = max(1, target_bytes // per_img)
    if N > 8:
        # Force at least two grid steps so the "parallel" batch axis actually
        # shards across both TensorCores on v7x (no effect on 1-TC v5e/v6e).
        half = max(8, (((N + 1) // 2) // 8) * 8)
        tb = min(tb, half)
    if tb >= N:
        return int(N)
    return int(max(8, (tb // 8) * 8))      # keep (TB, 1) output blocks 8-aligned


def clustering_loss(output: jax.Array, threshold: float, block_batch: int | None = None) -> jax.Array:
    """Pallas implementation of ClusteringLoss.forward.  output: (N, C, H, W)."""
    N, C, H, W = output.shape
    HW = H * W
    itemsize = jnp.dtype(output.dtype).itemsize
    tb = int(block_batch) if block_batch is not None else _choose_block_batch(N, C, HW, itemsize)

    num_blocks = pl.cdiv(N, tb)
    n_pad = num_blocks * tb

    # Free contiguous reshape: channel+spatial go to the 128-lane axis.
    x2d = output.reshape(N, C * HW)
    if n_pad != N:
        # Zero-padded images produce vmax=0 and are sliced off before the mean.
        x2d = jnp.pad(x2d, ((0, n_pad - N), (0, 0)))

    cost = pl.CostEstimate(
        flops=int(n_pad * HW * (C + 12)),              # channel sum + box adds + selects + 2S-box + max
        transcendentals=0,
        bytes_accessed=int(n_pad * C * HW * itemsize + n_pad * 4),
    )

    vmax = pl.pallas_call(
        _make_kernel(C, H, W),
        out_shape=jax.ShapeDtypeStruct((n_pad, 1), jnp.float32),
        grid=(num_blocks,),
        in_specs=[pl.BlockSpec((tb, C * HW), lambda n: (n, 0))],
        out_specs=pl.BlockSpec((tb, 1), lambda n: (n, 0)),
        compiler_params=pltpu.CompilerParams(
            dimension_semantics=("parallel",),         # disjoint output blocks -> safe on 2-TC chips
            vmem_limit_bytes=32 << 20,                 # footprint heuristic keeps us well under this on v5e/v6e/v7x
        ),
        cost_estimate=cost,
    )(x2d)

    vmax = vmax[:N, 0]
    return jnp.mean(jnp.maximum(vmax - threshold, 0.0))


def _reference(output: jax.Array, threshold: float) -> jax.Array:
    """Pure-JAX reference (mirrors the PyTorch module exactly)."""
    S = jnp.sum(output, axis=1)                             # (N, H, W)
    Sp = jnp.pad(S, ((0, 0), (1, 1), (1, 1)))               # zero 'same' padding
    N, H, W = S.shape
    box = jnp.zeros_like(S)
    for dy in range(3):
        for dx in range(3):
            box = box + Sp[:, dy:dy + H, dx:dx + W]
    F = 2.0 * S - box
    vmax = jnp.max(F, axis=(1, 2))                          # (N,)
    return jnp.mean(jnp.maximum(vmax - threshold, 0.0))


if __name__ == "__main__":
    key = jax.random.PRNGKey(0)

    # Primary small case: (batch, num_detectors, H, W) = (2, 4, 16, 16).
    x = jax.random.uniform(key, (2, 4, 16, 16), dtype=jnp.float32)
    for threshold in (1.0, -10.0):                          # -10 makes the loss nonzero
        loss = clustering_loss(x, threshold)
        jax.block_until_ready(loss)
        ref = _reference(x, threshold)
        np.testing.assert_allclose(np.asarray(loss), np.asarray(ref), rtol=1e-5, atol=1e-5)

    # Exercise the multi-block / padded path (batch not divisible by block_batch).
    x2 = jax.random.uniform(jax.random.PRNGKey(1), (20, 4, 16, 16), dtype=jnp.float32)
    loss2 = clustering_loss(x2, -10.0, block_batch=8)       # 3 grid steps, 4 padded images
    jax.block_until_ready(loss2)
    ref2 = _reference(x2, -10.0)
    np.testing.assert_allclose(np.asarray(loss2), np.asarray(ref2), rtol=1e-5, atol=1e-5)

    # Exercise the automatic block-batch heuristic (>= 2 parallel blocks for v7x).
    x3 = jax.random.uniform(jax.random.PRNGKey(2), (24, 4, 16, 16), dtype=jnp.float32)
    loss3 = clustering_loss(x3, -10.0)
    jax.block_until_ready(loss3)
    ref3 = _reference(x3, -10.0)
    np.testing.assert_allclose(np.asarray(loss3), np.asarray(ref3), rtol=1e-5, atol=1e-5)

    print("KERNEL_OK")
</pallas_src>

<mosaic_0001>
module attributes {stable_mosaic.version = 11 : i64} {
  func.func @kernel(%arg0: i32, %arg1: memref<2x1024xf32, #tpu.memory_space<vmem>>, %arg2: memref<2x1xf32, #tpu.memory_space<vmem>>) attributes {dimension_semantics = [#tpu.dimension_semantics<parallel>], iteration_bounds = array<i64: 1>, scalar_prefetch = 0 : i64, scratch_operands = 0 : i64, tpu.core_type = #tpu.core_type<tc>, window_params = [{transform_indices = @transform_0, window_bounds = array<i64: 2, 1024>}, {transform_indices = @transform_1, window_bounds = array<i64: 2, 1>}]} {
    %c0 = arith.constant 0 : index
    %c0_0 = arith.constant 0 : index
    %0 = vector.load %arg1[%c0, %c0_0] : memref<2x1024xf32, #tpu.memory_space<vmem>>, vector<2x256xf32>
    %c0_1 = arith.constant 0 : index
    %c256 = arith.constant 256 : index
    %1 = vector.load %arg1[%c0_1, %c256] : memref<2x1024xf32, #tpu.memory_space<vmem>>, vector<2x256xf32>
    %2 = arith.addf %0, %1 : vector<2x256xf32>
    %c0_2 = arith.constant 0 : index
    %c512 = arith.constant 512 : index
    %3 = vector.load %arg1[%c0_2, %c512] : memref<2x1024xf32, #tpu.memory_space<vmem>>, vector<2x256xf32>
    %4 = arith.addf %2, %3 : vector<2x256xf32>
    %c0_3 = arith.constant 0 : index
    %c768 = arith.constant 768 : index
    %5 = vector.load %arg1[%c0_3, %c768] : memref<2x1024xf32, #tpu.memory_space<vmem>>, vector<2x256xf32>
    %6 = arith.addf %4, %5 : vector<2x256xf32>
    %7 = tpu.iota {dimensions = array<i32: 1>} : vector<1x256xi32>
    %c16_i32 = arith.constant 16 : i32
    %c0_i32 = arith.constant 0 : i32
    %8 = arith.cmpi eq, %c16_i32, %c0_i32 : i32
    %c1_i32 = arith.constant 1 : i32
    %9 = arith.select %8, %c1_i32, %c16_i32 : i32
    %10 = vector.broadcast %9 : i32 to vector<1x256xi32>
    %11 = arith.remsi %7, %10 : vector<1x256xi32>
    %c0_i32_4 = arith.constant 0 : i32
    %12 = vector.broadcast %c0_i32_4 : i32 to vector<1x256xi32>
    %13 = arith.cmpi ne, %11, %12 : vector<1x256xi32>
    %c0_i32_5 = arith.constant 0 : i32
    %14 = vector.broadcast %c0_i32_5 : i32 to vector<1x256xi32>
    %15 = arith.cmpi slt, %11, %14 : vector<1x256xi32>
    %c0_i32_6 = arith.constant 0 : i32
    %16 = arith.cmpi slt, %9, %c0_i32_6 : i32
    %17 = vector.broadcast %16 : i1 to vector<1x256xi1>
    %18 = vector.broadcast %17 : vector<1x256xi1> to vector<1x256xi1>
    %19 = arith.xori %15, %18 : vector<1x256xi1>
    %20 = arith.andi %19, %13 : vector<1x256xi1>
    %21 = vector.broadcast %9 : i32 to vector<1x256xi32>
    %22 = arith.addi %11, %21 : vector<1x256xi32>
    %23 = arith.select %20, %22, %11 : vector<1x256xi1>, vector<1x256xi32>
    %c16_i32_7 = arith.constant 16 : i32
    %24 = vector.broadcast %c16_i32_7 : i32 to vector<1x256xi32>
    %25 = arith.cmpi sge, %7, %24 : vector<1x256xi32>
    %c240_i32 = arith.constant 240 : i32
    %26 = vector.broadcast %c240_i32 : i32 to vector<1x256xi32>
    %27 = arith.cmpi slt, %7, %26 : vector<1x256xi32>
    %c0_i32_8 = arith.constant 0 : i32
    %28 = vector.broadcast %c0_i32_8 : i32 to vector<1x256xi32>
    %29 = arith.cmpi ne, %23, %28 : vector<1x256xi32>
    %c15_i32 = arith.constant 15 : i32
    %30 = vector.broadcast %c15_i32 : i32 to vector<1x256xi32>
    %31 = arith.cmpi ne, %23, %30 : vector<1x256xi32>
    %c16_i32_9 = arith.constant 16 : i32
    %32 = tpu.dynamic_rotate %6 by %c16_i32_9 dim 1 : vector<2x256xf32>, i32 -> vector<2x256xf32>
    %c240_i32_10 = arith.constant 240 : i32
    %33 = tpu.dynamic_rotate %6 by %c240_i32_10 dim 1 : vector<2x256xf32>, i32 -> vector<2x256xf32>
    %cst = arith.constant 0.000000e+00 : f32
    %34 = vector.shape_cast %25 : vector<1x256xi1> to vector<1x256xi1>
    %35 = vector.broadcast %34 : vector<1x256xi1> to vector<2x256xi1>
    %36 = vector.broadcast %cst : f32 to vector<2x256xf32>
    %37 = arith.select %35, %32, %36 : vector<2x256xi1>, vector<2x256xf32>
    %38 = arith.addf %37, %6 : vector<2x256xf32>
    %cst_11 = arith.constant 0.000000e+00 : f32
    %39 = vector.shape_cast %27 : vector<1x256xi1> to vector<1x256xi1>
    %40 = vector.broadcast %39 : vector<1x256xi1> to vector<2x256xi1>
    %41 = vector.broadcast %cst_11 : f32 to vector<2x256xf32>
    %42 = arith.select %40, %33, %41 : vector<2x256xi1>, vector<2x256xf32>
    %43 = arith.addf %38, %42 : vector<2x256xf32>
    %c1_i32_12 = arith.constant 1 : i32
    %44 = tpu.dynamic_rotate %43 by %c1_i32_12 dim 1 : vector<2x256xf32>, i32 -> vector<2x256xf32>
    %c255_i32 = arith.constant 255 : i32
    %45 = tpu.dynamic_rotate %43 by %c255_i32 dim 1 : vector<2x256xf32>, i32 -> vector<2x256xf32>
    %cst_13 = arith.constant 0.000000e+00 : f32
    %46 = vector.shape_cast %29 : vector<1x256xi1> to vector<1x256xi1>
    %47 = vector.broadcast %46 : vector<1x256xi1> to vector<2x256xi1>
    %48 = vector.broadcast %cst_13 : f32 to vector<2x256xf32>
    %49 = arith.select %47, %44, %48 : vector<2x256xi1>, vector<2x256xf32>
    %50 = arith.addf %49, %43 : vector<2x256xf32>
    %cst_14 = arith.constant 0.000000e+00 : f32
    %51 = vector.shape_cast %31 : vector<1x256xi1> to vector<1x256xi1>
    %52 = vector.broadcast %51 : vector<1x256xi1> to vector<2x256xi1>
    %53 = vector.broadcast %cst_14 : f32 to vector<2x256xf32>
    %54 = arith.select %52, %45, %53 : vector<2x256xi1>, vector<2x256xf32>
    %55 = arith.addf %50, %54 : vector<2x256xf32>
    %cst_15 = arith.constant 2.000000e+00 : f32
    %56 = vector.broadcast %cst_15 : f32 to vector<2x256xf32>
    %57 = arith.mulf %56, %6 : vector<2x256xf32>
    %58 = arith.subf %57, %55 : vector<2x256xf32>
    %cst_16 = arith.constant dense<0xFF800000> : vector<2xf32>
    %59 = vector.multi_reduction <maximumf>, %58, %cst_16 [1] : vector<2x256xf32> to vector<2xf32>
    %60 = vector.shape_cast %59 : vector<2xf32> to vector<2x1xf32>
    %c0_17 = arith.constant 0 : index
    %c0_18 = arith.constant 0 : index
    %61 = vector.load %arg2[%c0_17, %c0_18] : memref<2x1xf32, #tpu.memory_space<vmem>>, vector<2x1xf32>
    tpu.vector_store %arg2[%c0_17, %c0_18], %60 {strides = array<i32>} : memref<2x1xf32, #tpu.memory_space<vmem>>, vector<2x1xf32>,
    return
  }
  func.func @transform_0(%arg0: i32) -> (i32, i32) {
    %c0_i32 = arith.constant 0 : i32
    %c0_i32_0 = arith.constant 0 : i32
    return %arg0, %c0_i32 : i32, i32
  }
  func.func @transform_1(%arg0: i32) -> (i32, i32) {
    %c0_i32 = arith.constant 0 : i32
    %c0_i32_0 = arith.constant 0 : i32
    return %arg0, %c0_i32 : i32, i32
  }
}

</mosaic_0001>

<llo_original>
// kernel: tpu_custom_call.1
$region0: #{tpu_custom_call.1}
  #allocation0 [shape = 'u32[]', space=smem, size = 0x4, offset = 0x4, fixed_abs, tag = 'smem constant byte address 0x4 - core index']
  #allocation1 [shape = 'u32[144,128]{1,0:T(1,128)}', space=vmem, size = 0x12000, scoped, tag = 'internal scratch']
  %s0 = inlined_call_operand.hbm [shape: f32[2,1024], index: 0, kind: input, shape index: {}]
  %s1 = inlined_call_operand.vmem [shape: f32[2,1], index: 1, kind: output, shape index: {}]
  %s2 = sld [smem:[#allocation0]]
  $region18: #{tpu_custom_call.1} parent=0
    _
  %s4 = ssub.s32 1, %s2
  %s5 = scalar_select 0, %s4, %s2
  $region1: #{tpu_custom_call.1} parent=0
    #allocation2 [shape = 'u8[8192]{0}', space=vmem, size = 0x2000, scoped, tag = 'input window, operand 0, single buffered']
    #allocation3 [shape = 's32[1]{0}', space=sflag, size = 0x4, scoped, tag = 'scoped memory for tpu_custom_call.1']
    %6 = vsyncpa [#allocation3], 0
    // Predicated region
    $region2: #{tpu_custom_call.1} parent=1 // pred_check
      _
    $region3: #{tpu_custom_call.1} parent=1 // pred_check_branch
      %8 = sbr.rel (0) target = $region5
    $region4: #{tpu_custom_call.1} parent=1 // pred_region
      %s10 = ssub.s32 256, 256
      %11 = vsyncadd [#allocation3], %s10
      %s13 = sshll.u32 [#allocation2], 4
      %s14 = int_to_ptr.vmem [resolvable:$true] %s13
      %16 = dma.hbm_to_vmem [thread:$0]  %s0, 256, %s14, [#allocation3]
    $region5: #{tpu_custom_call.1} parent=1 // pred_fallthru
      _
    // Predicated region
    $region6: #{tpu_custom_call.1} parent=1 // pred_check
      _
    $region7: #{tpu_custom_call.1} parent=1 // pred_check_branch
      %18 = sbr.rel (0) target = $region9
    $region8: #{tpu_custom_call.1} parent=1 // pred_region
      %19 = dma.done [#allocation3], 256
    $region9: #{tpu_custom_call.1} parent=1 // pred_fallthru
      _
    %v20 = vld [vmem:[#allocation2] sm:$0xf]
    %v21 = vld [vmem:[#allocation2 + $0x4] sm:$0xf]
    %v22 = vadd.f32 %v20, %v21
    %v23 = vld [vmem:[#allocation2 + $0x8] sm:$0xf]
    %v24 = vadd.f32 %v22, %v23
    %v25 = vld [vmem:[#allocation2 + $0xc] sm:$0xf]
    %v26 = vadd.f32 %v24, %v25
    %v27 = vlaneseq
    %v28 = vand.u32 %v27, 127
    %v29 = vadd.s32 %v28, 128
    %vm30 = vcmp.lt.s32.totalorder %v28, 0
    %v31 = vsub.s32 0, %v28
    %v32 = vsel %vm30, %v31, %v28
    %v33 = vshrl.u32 %v32, 4
    %v34 = vand.u32 %v32, 15
    %v35 = vsub.s32 0, %v34
    %v36 = vsel %vm30, %v35, %v34
    %vm37 = vcmp.lt.s32.totalorder %v29, 0
    %v38 = vsub.s32 0, %v29
    %v39 = vsel %vm37, %v38, %v29
    %v40 = vshrl.u32 %v39, 4
    %v41 = vand.u32 %v39, 15
    %v42 = vsub.s32 0, %v41
    %v43 = vsel %vm37, %v42, %v41
    %vm44 = vcmp.ne.s32.totalorder %v36, 0
    %vm45 = vcmp.ne.s32.totalorder %v43, 0
    %vm46 = vcmp.lt.s32.totalorder %v36, 0
    %vm47 = vcmp.lt.s32.totalorder %v43, 0
    %vm48 = vmand %vm46, %vm44
    %vm49 = vmand %vm47, %vm45
    %v50 = vadd.s32 %v36, 16
    %v51 = vadd.s32 %v43, 16
    %v52 = vsel %vm48, %v50, %v36
    %v53 = vsel %vm49, %v51, %v43
    %vm54 = vcmp.ge.s32.totalorder %v28, 16
    %vm55 = vcmp.ge.s32.totalorder %v29, 16
    %vm56 = vcmp.lt.s32.totalorder %v28, 240
    %vm57 = vcmp.lt.s32.totalorder %v29, 240
    %vm58 = vcmp.ne.s32.totalorder %v52, 0
    %vm59 = vcmp.ne.s32.totalorder %v53, 0
    %vm60 = vcmp.ne.s32.totalorder %v52, 15
    %vm61 = vcmp.ne.s32.totalorder %v53, 15
    %v64 = vunpack.c.l.s4 1983009808
    %v65 = vunpack.c.0.s8 %v64
    %v66 = vlaneseq
    %v67 = vshrl.u32 %v66, 7
    %v68 = vsub.s32 %v65, %v67
    %v69 = vrot.slane %v26, %v68
    %v70 = vcombine.high %v69, %v69
    %73 = vrot.lane.b32.xlu0 %v69, 16
    %v74 = vpop.permute.xlu0 %73
    %75 = vrot.lane.b32.xlu0 %v70, 16
    %v76 = vpop.permute.xlu0 %75
    %vm77 = vcmp.lt.s32.totalorder %v28, 16
    %v78 = vsel %vm77, %v74, %v76
    %v79 = vsel %vm77, %v76, %v74
    %80 = vrot.lane.b32.xlu0 %v69, 112
    %v81 = vpop.permute.xlu0 %80
    %82 = vrot.lane.b32.xlu0 %v70, 112
    %v83 = vpop.permute.xlu0 %82
    %vm84 = vcmp.lt.s32.totalorder %v28, 112
    %v85 = vsel %vm84, %v81, %v83
    %v86 = vsel %vm84, %v83, %v81
    %v87 = vsel %vm54, 1, 0
    %v88 = vsel %vm55, 1, 0
    %vm89 = vcmp.eq.s32.totalorder %v87, 1
    %vm90 = vcmp.eq.s32.totalorder %v88, 1
    %v91 = vsel %vm89, %v79, 0.0
    %v92 = vsel %vm90, %v78, 0.0
    %v93 = vadd.f32 %v91, %v69
    %v94 = vadd.f32 %v92, %v70
    %v95 = vsel %vm56, 1, 0
    %v96 = vsel %vm57, 1, 0
    %vm97 = vcmp.eq.s32.totalorder %v95, 1
    %vm98 = vcmp.eq.s32.totalorder %v96, 1
    %v99 = vsel %vm97, %v85, 0.0
    %v100 = vsel %vm98, %v86, 0.0
    %v101 = vadd.f32 %v93, %v99
    %v102 = vadd.f32 %v94, %v100
    %103 = vrot.lane.b32.xlu0 %v101, 1
    %v104 = vpop.permute.xlu0 %103
    %105 = vrot.lane.b32.xlu0 %v102, 1
    %v106 = vpop.permute.xlu0 %105
    %vm107 = vcmp.lt.s32.totalorder %v28, 1
    %v108 = vsel %vm107, %v104, %v106
    %v109 = vsel %vm107, %v106, %v104
    %110 = vrot.lane.b32.xlu0 %v101, 127
    %v111 = vpop.permute.xlu0 %110
    %112 = vrot.lane.b32.xlu0 %v102, 127
    %v113 = vpop.permute.xlu0 %112
    %vm114 = vcmp.lt.s32.totalorder %v28, 127
    %v115 = vsel %vm114, %v111, %v113
    %v116 = vsel %vm114, %v113, %v111
    %v117 = vsel %vm58, 1, 0
    %v118 = vsel %vm59, 1, 0
    %vm119 = vcmp.eq.s32.totalorder %v117, 1
    %vm120 = vcmp.eq.s32.totalorder %v118, 1
    %v121 = vsel %vm119, %v109, 0.0
    %v122 = vsel %vm120, %v108, 0.0
    %v123 = vadd.f32 %v121, %v101
    %v124 = vadd.f32 %v122, %v102
    %v125 = vsel %vm60, 1, 0
    %v126 = vsel %vm61, 1, 0
    %vm127 = vcmp.eq.s32.totalorder %v125, 1
    %vm128 = vcmp.eq.s32.totalorder %v126, 1
    %v129 = vsel %vm127, %v115, 0.0
    %v130 = vsel %vm128, %v116, 0.0
    %v131 = vadd.f32 %v123, %v129
    %v132 = vadd.f32 %v124, %v130
    %v133 = vmul.f32 %v26, 2.0
    %v136 = vcombine.low %v131, %v132
    %v138 = vunpack.c.l.s4 1983009808
    %v139 = vunpack.c.0.s8 %v138
    %v140 = vlaneseq
    %v141 = vshrl.u32 %v140, 7
    %v142 = vsub.s32 %v139, %v141
    %v143 = vrot.slane %v136, %v142
    %v145 = vsub.f32 %v133, %v143
    %v148 = vunpack.c.l.s4 1983009808
    %v149 = vunpack.c.0.s8 %v148
    %v150 = vlaneseq
    %v151 = vshrl.u32 %v150, 7
    %v152 = vsub.s32 %v149, %v151
    %v153 = vrot.slane %v145, %v152
    %v154 = vcombine.high %v153, %v153
    %vm157 = vcmask 1041408
    %v158 = vsel %vm157, %v153, -inf
    %v159 = vsel %vm157, %v154, -inf
    %v160 = vmax.f32 %v158, %v159
    %161 = vmax.xlane.f32.xlu0 %v160
    %v162 = vpop.xlane.xlu0 %161
    %vm163 = vcmask 1024
    %164 = vst.msk [vmem:[%s1] sm:$0x3] %vm163, %v162
    // Predicated region
    $region10: #{tpu_custom_call.1} parent=1 // pred_check
      _
    $region11: #{tpu_custom_call.1} parent=1 // pred_check_branch
      %166 = sbr.rel (0) target = $region13
    $region12: #{tpu_custom_call.1} parent=1 // pred_region
      _
    $region13: #{tpu_custom_call.1} parent=1 // pred_fallthru
      _
    // Predicated region
    $region14: #{tpu_custom_call.1} parent=1 // pred_check
      _
    $region15: #{tpu_custom_call.1} parent=1 // pred_check_branch
      %168 = sbr.rel (0) target = $region17
    $region16: #{tpu_custom_call.1} parent=1 // pred_region
      _
    $region17: #{tpu_custom_call.1} parent=1 // pred_fallthru
      _
    %169 = vsyncpa [#allocation3], 1

</llo_original>
